<compile_context>
chip_gen: v5e
topology: v5e:2x2
jax: 0.10.0
libtpu: 0.0.40
codegen_flags: <defaults>
</compile_context>

<pallas_src>
import jax
import jax.numpy as jnp
from jax.experimental import pallas as pl
from jax.experimental.pallas import tpu as pltpu


def head_kernel(x_ref, wf_ref, bf_ref, wa_ref, ba_ref, wh_ref, bh_ref, o_ref):
    # fc_fusion: h = x @ Wf + bf   (bf16 operands, f32 accumulation)
    h = jnp.dot(x_ref[...], wf_ref[...],
                preferred_element_type=jnp.float32) + bf_ref[...]
    # attention: a = sigmoid(h @ Wa + ba); feat = a * h
    s = jnp.dot(h.astype(jnp.bfloat16), wa_ref[...],
                preferred_element_type=jnp.float32) + ba_ref[...]
    a = jax.nn.sigmoid(s)            # EUP transcendentals (free slot vs MXU)
    feat = a * h
    # fc_head: out = feat @ Wh + bh   (Wh/bh padded to 128 lanes in wrapper)
    out = jnp.dot(feat.astype(jnp.bfloat16), wh_ref[...],
                  preferred_element_type=jnp.float32) + bh_ref[...]
    o_ref[...] = out.astype(o_ref.dtype)


def _round_up(x, m):
    return (x + m - 1) // m * m


def get_head_forward(x, params, *, tb=None):
    """x: [B, feature_size] float32. Returns [B, num_classes] float32."""
    wf, bf, wa, ba, wh, bh = params
    B, F = x.shape
    fusion = wf.shape[1]
    num_classes = wh.shape[1]

    # Batch tile: fill MXU rows; for small B take the whole (padded) batch.
    if tb is None:
        tb = min(512, _round_up(B, 16))
    Bp = _round_up(B, tb)
    if Bp != B:
        x = jnp.pad(x, ((0, Bp - B), (0, 0)))

    # Pad the class dimension to a lane-dense 128 (unmasked stores, full MXU
    # columns); slice the real classes back out after the call.
    ncp = _round_up(num_classes, 128)
    if ncp != num_classes:
        wh = jnp.pad(wh, ((0, 0), (0, ncp - num_classes)))
        bh = jnp.pad(bh, ((0, 0), (0, ncp - num_classes)))

    # bf16 activations/weights; f32 biases and accumulation.
    xb = x.astype(jnp.bfloat16)
    wfb = wf.astype(jnp.bfloat16)
    wab = wa.astype(jnp.bfloat16)
    whb = wh.astype(jnp.bfloat16)
    bf32 = bf.astype(jnp.float32)
    ba32 = ba.astype(jnp.float32)
    bh32 = bh.astype(jnp.float32)

    grid = (Bp // tb,)
    out = pl.pallas_call(
        head_kernel,
        out_shape=jax.ShapeDtypeStruct((Bp, ncp), jnp.float32),
        grid_spec=pltpu.PrefetchScalarGridSpec(
            num_scalar_prefetch=0,
            grid=grid,
            in_specs=[
                pl.BlockSpec((tb, F), lambda i: (i, 0)),                # x tile
                pl.BlockSpec((F, fusion), lambda i: (0, 0)),            # Wf (resident)
                pl.BlockSpec((1, fusion), lambda i: (0, 0)),            # bf
                pl.BlockSpec((fusion, fusion), lambda i: (0, 0)),       # Wa (resident)
                pl.BlockSpec((1, fusion), lambda i: (0, 0)),            # ba
                pl.BlockSpec((fusion, ncp), lambda i: (0, 0)),          # Wh (padded, resident)
                pl.BlockSpec((1, ncp), lambda i: (0, 0)),               # bh (padded)
            ],
            out_specs=pl.BlockSpec((tb, ncp), lambda i: (i, 0)),
        ),
        compiler_params=pltpu.CompilerParams(
            dimension_semantics=("parallel",)),
    )(xb, wfb, bf32, wab, ba32, whb, bh32)

    return out[:B, :num_classes]


def init_params(key, feature_size=512, fusion_size=256, num_classes=1):
    ks = jax.random.split(key, 6)

    # PyTorch-like uniform(-1/sqrt(fan_in), 1/sqrt(fan_in)) init, deterministic.
    def uni(k, shape, fan_in):
        bound = 1.0 / jnp.sqrt(fan_in)
        return jax.random.uniform(k, shape, jnp.float32, -bound, bound)

    wf = uni(ks[0], (feature_size, fusion_size), feature_size)
    bf = uni(ks[1], (1, fusion_size), feature_size)
    wa = uni(ks[2], (fusion_size, fusion_size), fusion_size)
    ba = uni(ks[3], (1, fusion_size), fusion_size)
    wh = uni(ks[4], (fusion_size, num_classes), fusion_size)
    bh = uni(ks[5], (1, num_classes), fusion_size)
    return (wf, bf, wa, ba, wh, bh)


def reference_forward(x, params):
    wf, bf, wa, ba, wh, bh = params
    h = x @ wf + bf
    a = jax.nn.sigmoid(h @ wa + ba)
    feat = a * h
    return feat @ wh + bh


if __name__ == "__main__":
    key = jax.random.PRNGKey(0)
    kx, kp = jax.random.split(key)

    B, feature_size, fusion_size, num_classes = 16, 512, 256, 1
    x = jax.random.normal(kx, (B, feature_size), jnp.float32)
    params = init_params(kp, feature_size, fusion_size, num_classes)

    out = get_head_forward(x, params)
    out = jax.block_until_ready(out)

    ref = reference_forward(x, params)  # full-f32 reference (module semantics)
    assert out.shape == (B, num_classes)
    # bf16 inputs/weights with f32 accumulation => loosened tolerances.
    assert jnp.allclose(out, ref, atol=2e-2, rtol=2e-2)

    print("KERNEL_OK")
</pallas_src>

<mosaic_0001>
module attributes {stable_mosaic.version = 11 : i64} {
  func.func @head_kernel(%arg0: i32, %arg1: memref<16x512xbf16, #tpu.memory_space<vmem>>, %arg2: memref<512x256xbf16, #tpu.memory_space<vmem>>, %arg3: memref<1x256xf32, #tpu.memory_space<vmem>>, %arg4: memref<256x256xbf16, #tpu.memory_space<vmem>>, %arg5: memref<1x256xf32, #tpu.memory_space<vmem>>, %arg6: memref<256x128xbf16, #tpu.memory_space<vmem>>, %arg7: memref<1x128xf32, #tpu.memory_space<vmem>>, %arg8: memref<16x128xf32, #tpu.memory_space<vmem>>) attributes {dimension_semantics = [#tpu.dimension_semantics<parallel>], iteration_bounds = array<i64: 1>, scalar_prefetch = 0 : i64, scratch_operands = 0 : i64, tpu.core_type = #tpu.core_type<tc>, window_params = [{transform_indices = @transform_0, window_bounds = array<i64: 16, 512>}, {pipeline_mode = #tpu.pipeline_mode<synchronous>, transform_indices = @transform_1, window_bounds = array<i64: 512, 256>}, {pipeline_mode = #tpu.pipeline_mode<synchronous>, transform_indices = @transform_2, window_bounds = array<i64: 1, 256>}, {pipeline_mode = #tpu.pipeline_mode<synchronous>, transform_indices = @transform_3, window_bounds = array<i64: 256, 256>}, {pipeline_mode = #tpu.pipeline_mode<synchronous>, transform_indices = @transform_4, window_bounds = array<i64: 1, 256>}, {pipeline_mode = #tpu.pipeline_mode<synchronous>, transform_indices = @transform_5, window_bounds = array<i64: 256, 128>}, {pipeline_mode = #tpu.pipeline_mode<synchronous>, transform_indices = @transform_6, window_bounds = array<i64: 1, 128>}, {transform_indices = @transform_7, window_bounds = array<i64: 16, 128>}]} {
    %c0 = arith.constant 0 : index
    %c0_0 = arith.constant 0 : index
    %0 = vector.load %arg1[%c0, %c0_0] : memref<16x512xbf16, #tpu.memory_space<vmem>>, vector<16x512xbf16>
    %c0_1 = arith.constant 0 : index
    %c0_2 = arith.constant 0 : index
    %1 = vector.load %arg2[%c0_1, %c0_2] : memref<512x256xbf16, #tpu.memory_space<vmem>>, vector<512x256xbf16>
    %cst = arith.constant dense<0.000000e+00> : vector<16x256xf32>
    %2 = tpu.matmul %0, %1, %cst {dimension_numbers = #tpu.dot_dimension_numbers<[1], [0], [0], [1], [0, 0, 1, 1], [], []>} : vector<16x512xbf16>, vector<512x256xbf16>, vector<16x256xf32> -> vector<16x256xf32>
    %c0_3 = arith.constant 0 : index
    %c0_4 = arith.constant 0 : index
    %3 = vector.load %arg3[%c0_3, %c0_4] : memref<1x256xf32, #tpu.memory_space<vmem>>, vector<1x256xf32>
    %4 = vector.broadcast %3 : vector<1x256xf32> to vector<16x256xf32>
    %5 = arith.addf %2, %4 : vector<16x256xf32>
    %6 = arith.truncf %5 : vector<16x256xf32> to vector<16x256xbf16>
    %c0_5 = arith.constant 0 : index
    %c0_6 = arith.constant 0 : index
    %7 = vector.load %arg4[%c0_5, %c0_6] : memref<256x256xbf16, #tpu.memory_space<vmem>>, vector<256x256xbf16>
    %cst_7 = arith.constant dense<0.000000e+00> : vector<16x256xf32>
    %8 = tpu.matmul %6, %7, %cst_7 {dimension_numbers = #tpu.dot_dimension_numbers<[1], [0], [0], [1], [0, 0, 1, 1], [], []>} : vector<16x256xbf16>, vector<256x256xbf16>, vector<16x256xf32> -> vector<16x256xf32>
    %c0_8 = arith.constant 0 : index
    %c0_9 = arith.constant 0 : index
    %9 = vector.load %arg5[%c0_8, %c0_9] : memref<1x256xf32, #tpu.memory_space<vmem>>, vector<1x256xf32>
    %10 = vector.broadcast %9 : vector<1x256xf32> to vector<16x256xf32>
    %11 = arith.addf %8, %10 : vector<16x256xf32>
    %12 = arith.negf %11 : vector<16x256xf32>
    %13 = math.exp %12 : vector<16x256xf32>
    %cst_10 = arith.constant 1.000000e+00 : f32
    %14 = vector.broadcast %cst_10 : f32 to vector<16x256xf32>
    %15 = arith.addf %14, %13 : vector<16x256xf32>
    %16 = arith.divf %14, %15 : vector<16x256xf32>
    %17 = arith.mulf %16, %5 : vector<16x256xf32>
    %18 = arith.truncf %17 : vector<16x256xf32> to vector<16x256xbf16>
    %c0_11 = arith.constant 0 : index
    %c0_12 = arith.constant 0 : index
    %19 = vector.load %arg6[%c0_11, %c0_12] : memref<256x128xbf16, #tpu.memory_space<vmem>>, vector<256x128xbf16>
    %cst_13 = arith.constant dense<0.000000e+00> : vector<16x128xf32>
    %20 = tpu.matmul %18, %19, %cst_13 {dimension_numbers = #tpu.dot_dimension_numbers<[1], [0], [0], [1], [0, 0, 1, 1], [], []>} : vector<16x256xbf16>, vector<256x128xbf16>, vector<16x128xf32> -> vector<16x128xf32>
    %c0_14 = arith.constant 0 : index
    %c0_15 = arith.constant 0 : index
    %21 = vector.load %arg7[%c0_14, %c0_15] : memref<1x128xf32, #tpu.memory_space<vmem>>, vector<1x128xf32>
    %22 = vector.broadcast %21 : vector<1x128xf32> to vector<16x128xf32>
    %23 = arith.addf %20, %22 : vector<16x128xf32>
    %c0_16 = arith.constant 0 : index
    %c0_17 = arith.constant 0 : index
    %24 = vector.load %arg8[%c0_16, %c0_17] : memref<16x128xf32, #tpu.memory_space<vmem>>, vector<16x128xf32>
    tpu.vector_store %arg8[%c0_16, %c0_17], %23 {strides = array<i32>} : memref<16x128xf32, #tpu.memory_space<vmem>>, vector<16x128xf32>,
    return
  }
  func.func @transform_0(%arg0: i32) -> (i32, i32) {
    %c0_i32 = arith.constant 0 : i32
    %c0_i32_0 = arith.constant 0 : i32
    return %arg0, %c0_i32 : i32, i32
  }
  func.func @transform_1(%arg0: i32) -> (i32, i32) {
    %c0_i32 = arith.constant 0 : i32
    %c0_i32_0 = arith.constant 0 : i32
    %c0_i32_1 = arith.constant 0 : i32
    return %c0_i32, %c0_i32_0 : i32, i32
  }
  func.func @transform_2(%arg0: i32) -> (i32, i32) {
    %c0_i32 = arith.constant 0 : i32
    %c0_i32_0 = arith.constant 0 : i32
    %c0_i32_1 = arith.constant 0 : i32
    return %c0_i32, %c0_i32_0 : i32, i32
  }
  func.func @transform_3(%arg0: i32) -> (i32, i32) {
    %c0_i32 = arith.constant 0 : i32
    %c0_i32_0 = arith.constant 0 : i32
    %c0_i32_1 = arith.constant 0 : i32
    return %c0_i32, %c0_i32_0 : i32, i32
  }
  func.func @transform_4(%arg0: i32) -> (i32, i32) {
    %c0_i32 = arith.constant 0 : i32
    %c0_i32_0 = arith.constant 0 : i32
    %c0_i32_1 = arith.constant 0 : i32
    return %c0_i32, %c0_i32_0 : i32, i32
  }
  func.func @transform_5(%arg0: i32) -> (i32, i32) {
    %c0_i32 = arith.constant 0 : i32
    %c0_i32_0 = arith.constant 0 : i32
    %c0_i32_1 = arith.constant 0 : i32
    return %c0_i32, %c0_i32_0 : i32, i32
  }
  func.func @transform_6(%arg0: i32) -> (i32, i32) {
    %c0_i32 = arith.constant 0 : i32
    %c0_i32_0 = arith.constant 0 : i32
    %c0_i32_1 = arith.constant 0 : i32
    return %c0_i32, %c0_i32_0 : i32, i32
  }
  func.func @transform_7(%arg0: i32) -> (i32, i32) {
    %c0_i32 = arith.constant 0 : i32
    %c0_i32_0 = arith.constant 0 : i32
    return %arg0, %c0_i32 : i32, i32
  }
}

</mosaic_0001>

<llo_original>
// kernel: tpu_custom_call.1
$region0: #{tpu_custom_call.1}
  #allocation0 [shape = 'u32[]', space=smem, size = 0x4, offset = 0x4, fixed_abs, tag = 'smem constant byte address 0x4 - core index']
  #allocation1 [shape = 'u32[72,128]{1,0:T(1,128)}', space=vmem, size = 0x9000, scoped, tag = 'internal scratch']
  %s0 = inlined_call_operand.hbm [shape: bf16[16,512], index: 0, kind: input, shape index: {}]
  %s1 = inlined_call_operand.hbm [shape: bf16[512,256], index: 1, kind: input, shape index: {}]
  %s2 = inlined_call_operand.hbm [shape: f32[1,256], index: 2, kind: input, shape index: {}]
  %s3 = inlined_call_operand.hbm [shape: bf16[256,256], index: 3, kind: input, shape index: {}]
  %s4 = inlined_call_operand.vmem [shape: f32[1,256], index: 4, kind: input, shape index: {}]
  %s5 = inlined_call_operand.hbm [shape: bf16[256,128], index: 5, kind: input, shape index: {}]
  %s6 = inlined_call_operand.vmem [shape: f32[1,128], index: 6, kind: input, shape index: {}]
  %s7 = inlined_call_operand.hbm [shape: f32[16,128], index: 7, kind: output, shape index: {}]
  %s8 = sld [smem:[#allocation0]]
  $region58: #{tpu_custom_call.1} parent=0
    _
  %s10 = ssub.s32 1, %s8
  %s11 = scalar_select 0, %s10, %s8
  $region1: #{tpu_custom_call.1} parent=0
    #allocation2 [shape = 'u8[16384]{0}', space=vmem, size = 0x4000, scoped, tag = 'input window, operand 0, single buffered']
    #allocation3 [shape = 's32[1]{0}', space=sflag, size = 0x4, scoped, tag = 'scoped memory for tpu_custom_call.1']
    #allocation4 [shape = 's32[1]{0}', space=sflag, size = 0x4, scoped, tag = 'scoped memory for tpu_custom_call.1']
    #allocation5 [shape = 'u8[262144]{0}', space=vmem, size = 0x40000, scoped, tag = 'input window, operand 1, single buffered']
    #allocation6 [shape = 's32[1]{0}', space=sflag, size = 0x4, scoped, tag = 'scoped memory for tpu_custom_call.1']
    #allocation7 [shape = 'u8[1024]{0}', space=vmem, size = 0x400, scoped, tag = 'input window, operand 2, single buffered']
    #allocation8 [shape = 'u8[131072]{0}', space=vmem, size = 0x20000, scoped, tag = 'input window, operand 3, single buffered']
    #allocation9 [shape = 's32[1]{0}', space=sflag, size = 0x4, scoped, tag = 'scoped memory for tpu_custom_call.1']
    #allocation10 [shape = 'u8[65536]{0}', space=vmem, size = 0x10000, scoped, tag = 'input window, operand 5, single buffered']
    #allocation11 [shape = 'u8[8192]{0}', space=vmem, size = 0x2000, scoped, tag = 'output window, operand 0, single buffered']
    %12 = vsyncpa [#allocation3], 0
    %13 = vsyncpa [#allocation6], 0
    %14 = vsyncpa [#allocation9], 0
    %15 = vsyncpa [#allocation4], 0
    // Predicated region
    $region2: #{tpu_custom_call.1} parent=1 // pred_check
      _
    $region3: #{tpu_custom_call.1} parent=1 // pred_check_branch
      %17 = sbr.rel (0) target = $region5
    $region4: #{tpu_custom_call.1} parent=1 // pred_region
      %19 = vsyncadd [#allocation3], 0
      %s20 = sshll.u32 %s0, 4
      %s21 = int_to_ptr.hbm [resolvable:$true] %s20
      %s22 = sshll.u32 [#allocation2], 4
      %s23 = int_to_ptr.vmem [resolvable:$true] %s22
      %28 = dma.hbm_to_vmem [thread:$0]  %s21, 512, %s23, [#allocation3], 256, 256, 16
    $region5: #{tpu_custom_call.1} parent=1 // pred_fallthru
      _
    // Predicated region
    $region6: #{tpu_custom_call.1} parent=1 // pred_check
      _
    $region7: #{tpu_custom_call.1} parent=1 // pred_check_branch
      %30 = sbr.rel (0) target = $region9
    $region8: #{tpu_custom_call.1} parent=1 // pred_region
      %32 = vsyncadd [#allocation6], 0
      %s33 = sshll.u32 %s1, 4
      %s34 = int_to_ptr.hbm [resolvable:$true] %s33
      %s35 = sshll.u32 [#allocation5], 4
      %s36 = int_to_ptr.vmem [resolvable:$true] %s35
      %41 = dma.hbm_to_vmem [thread:$0]  %s34, 8192, %s36, [#allocation6], 128, 128, 8
    $region9: #{tpu_custom_call.1} parent=1 // pred_fallthru
      _
    // Predicated region
    $region10: #{tpu_custom_call.1} parent=1 // pred_check
      _
    $region11: #{tpu_custom_call.1} parent=1 // pred_check_branch
      %43 = sbr.rel (0) target = $region13
    $region12: #{tpu_custom_call.1} parent=1 // pred_region
      %45 = vsyncadd [#allocation6], 0
      %s47 = sshll.u32 %s2, 4
      %s48 = int_to_ptr.hbm [resolvable:$true] %s47
      %s49 = sshll.u32 [#allocation7], 4
      %s50 = int_to_ptr.vmem [resolvable:$true] %s49
      %52 = dma.hbm_to_vmem [thread:$0]  %s48, 32, %s50, [#allocation6]
    $region13: #{tpu_custom_call.1} parent=1 // pred_fallthru
      _
    // Predicated region
    $region14: #{tpu_custom_call.1} parent=1 // pred_check
      _
    $region15: #{tpu_custom_call.1} parent=1 // pred_check_branch
      %54 = sbr.rel (0) target = $region17
    $region16: #{tpu_custom_call.1} parent=1 // pred_region
      %56 = vsyncadd [#allocation9], 0
      %s57 = sshll.u32 %s3, 4
      %s58 = int_to_ptr.hbm [resolvable:$true] %s57
      %s59 = sshll.u32 [#allocation8], 4
      %s60 = int_to_ptr.vmem [resolvable:$true] %s59
      %65 = dma.hbm_to_vmem [thread:$0]  %s58, 4096, %s60, [#allocation9], 128, 128, 8
    $region17: #{tpu_custom_call.1} parent=1 // pred_fallthru
      _
    // Predicated region
    $region18: #{tpu_custom_call.1} parent=1 // pred_check
      _
    $region19: #{tpu_custom_call.1} parent=1 // pred_check_branch
      %67 = sbr.rel (0) target = $region21
    $region20: #{tpu_custom_call.1} parent=1 // pred_region
      _
    $region21: #{tpu_custom_call.1} parent=1 // pred_fallthru
      _
    // Predicated region
    $region22: #{tpu_custom_call.1} parent=1 // pred_check
      _
    $region23: #{tpu_custom_call.1} parent=1 // pred_check_branch
      %69 = sbr.rel (0) target = $region25
    $region24: #{tpu_custom_call.1} parent=1 // pred_region
      %71 = vsyncadd [#allocation9], 0
      %s72 = sshll.u32 %s5, 4
      %s73 = int_to_ptr.hbm [resolvable:$true] %s72
      %s74 = sshll.u32 [#allocation10], 4
      %s75 = int_to_ptr.vmem [resolvable:$true] %s74
      %80 = dma.hbm_to_vmem [thread:$0]  %s73, 2048, %s75, [#allocation9], 64, 64, 4
    $region25: #{tpu_custom_call.1} parent=1 // pred_fallthru
      _
    // Predicated region
    $region26: #{tpu_custom_call.1} parent=1 // pred_check
      _
    $region27: #{tpu_custom_call.1} parent=1 // pred_check_branch
      %82 = sbr.rel (0) target = $region29
    $region28: #{tpu_custom_call.1} parent=1 // pred_region
      _
    $region29: #{tpu_custom_call.1} parent=1 // pred_fallthru
      _
    // Predicated region
    $region30: #{tpu_custom_call.1} parent=1 // pred_check
      _
    $region31: #{tpu_custom_call.1} parent=1 // pred_check_branch
      %84 = sbr.rel (0) target = $region33
    $region32: #{tpu_custom_call.1} parent=1 // pred_region
      %86 = dma.done [#allocation3], 512
    $region33: #{tpu_custom_call.1} parent=1 // pred_fallthru
      _
    // Predicated region
    $region34: #{tpu_custom_call.1} parent=1 // pred_check
      _
    $region35: #{tpu_custom_call.1} parent=1 // pred_check_branch
      %88 = sbr.rel (0) target = $region37
    $region36: #{tpu_custom_call.1} parent=1 // pred_region
      %90 = dma.done [#allocation6], 8192
    $region37: #{tpu_custom_call.1} parent=1 // pred_fallthru
      _
    // Predicated region
    $region38: #{tpu_custom_call.1} parent=1 // pred_check
      _
    $region39: #{tpu_custom_call.1} parent=1 // pred_check_branch
      %92 = sbr.rel (0) target = $region41
    $region40: #{tpu_custom_call.1} parent=1 // pred_region
      %94 = dma.done [#allocation6], 32
    $region41: #{tpu_custom_call.1} parent=1 // pred_fallthru
      _
    // Predicated region
    $region42: #{tpu_custom_call.1} parent=1 // pred_check
      _
    $region43: #{tpu_custom_call.1} parent=1 // pred_check_branch
      %96 = sbr.rel (0) target = $region45
    $region44: #{tpu_custom_call.1} parent=1 // pred_region
      %98 = dma.done [#allocation9], 4096
    $region45: #{tpu_custom_call.1} parent=1 // pred_fallthru
      _
    // Predicated region
    $region46: #{tpu_custom_call.1} parent=1 // pred_check
      _
    $region47: #{tpu_custom_call.1} parent=1 // pred_check_branch
      %100 = sbr.rel (0) target = $region49
    $region48: #{tpu_custom_call.1} parent=1 // pred_region
      %102 = dma.done [#allocation9], 2048
    $region49: #{tpu_custom_call.1} parent=1 // pred_fallthru
      _
    %v103 = vld [vmem:[#allocation2] sm:$0xff]
    %v104 = vld [vmem:[#allocation2 + $0x8] sm:$0xff]
    %v105 = vld [vmem:[#allocation2 + $0x10] sm:$0xff]
    %v106 = vld [vmem:[#allocation2 + $0x18] sm:$0xff]
    %v107 = vld [vmem:[#allocation5] sm:$0xff]
    %v108 = vld [vmem:[#allocation5 + $0x8] sm:$0xff]
    %v109 = vld [vmem:[#allocation5 + $0x10] sm:$0xff]
    %v110 = vld [vmem:[#allocation5 + $0x18] sm:$0xff]
    %v111 = vld [vmem:[#allocation5 + $0x20] sm:$0xff]
    %v112 = vld [vmem:[#allocation5 + $0x28] sm:$0xff]
    %v113 = vld [vmem:[#allocation5 + $0x30] sm:$0xff]
    %v114 = vld [vmem:[#allocation5 + $0x38] sm:$0xff]
    %v115 = vld [vmem:[#allocation5 + $0x40] sm:$0xff]
    %v116 = vld [vmem:[#allocation5 + $0x48] sm:$0xff]
    %v117 = vld [vmem:[#allocation5 + $0x50] sm:$0xff]
    %v118 = vld [vmem:[#allocation5 + $0x58] sm:$0xff]
    %v119 = vld [vmem:[#allocation5 + $0x60] sm:$0xff]
    %v120 = vld [vmem:[#allocation5 + $0x68] sm:$0xff]
    %v121 = vld [vmem:[#allocation5 + $0x70] sm:$0xff]
    %v122 = vld [vmem:[#allocation5 + $0x78] sm:$0xff]
    %v123 = vld [vmem:[#allocation5 + $0x80] sm:$0xff]
    %v124 = vld [vmem:[#allocation5 + $0x88] sm:$0xff]
    %v125 = vld [vmem:[#allocation5 + $0x90] sm:$0xff]
    %v126 = vld [vmem:[#allocation5 + $0x98] sm:$0xff]
    %v127 = vld [vmem:[#allocation5 + $0xa0] sm:$0xff]
    %v128 = vld [vmem:[#allocation5 + $0xa8] sm:$0xff]
    %v129 = vld [vmem:[#allocation5 + $0xb0] sm:$0xff]
    %v130 = vld [vmem:[#allocation5 + $0xb8] sm:$0xff]
    %v131 = vld [vmem:[#allocation5 + $0xc0] sm:$0xff]
    %v132 = vld [vmem:[#allocation5 + $0xc8] sm:$0xff]
    %v133 = vld [vmem:[#allocation5 + $0xd0] sm:$0xff]
    %v134 = vld [vmem:[#allocation5 + $0xd8] sm:$0xff]
    %v135 = vld [vmem:[#allocation5 + $0xe0] sm:$0xff]
    %v136 = vld [vmem:[#allocation5 + $0xe8] sm:$0xff]
    %v137 = vld [vmem:[#allocation5 + $0xf0] sm:$0xff]
    %v138 = vld [vmem:[#allocation5 + $0xf8] sm:$0xff]
    %v139 = vld [vmem:[#allocation5 + $0x100] sm:$0xff]
    %v140 = vld [vmem:[#allocation5 + $0x108] sm:$0xff]
    %v141 = vld [vmem:[#allocation5 + $0x110] sm:$0xff]
    %v142 = vld [vmem:[#allocation5 + $0x118] sm:$0xff]
    %v143 = vld [vmem:[#allocation5 + $0x120] sm:$0xff]
    %v144 = vld [vmem:[#allocation5 + $0x128] sm:$0xff]
    %v145 = vld [vmem:[#allocation5 + $0x130] sm:$0xff]
    %v146 = vld [vmem:[#allocation5 + $0x138] sm:$0xff]
    %v147 = vld [vmem:[#allocation5 + $0x140] sm:$0xff]
    %v148 = vld [vmem:[#allocation5 + $0x148] sm:$0xff]
    %v149 = vld [vmem:[#allocation5 + $0x150] sm:$0xff]
    %v150 = vld [vmem:[#allocation5 + $0x158] sm:$0xff]
    %v151 = vld [vmem:[#allocation5 + $0x160] sm:$0xff]
    %v152 = vld [vmem:[#allocation5 + $0x168] sm:$0xff]
    %v153 = vld [vmem:[#allocation5 + $0x170] sm:$0xff]
    %v154 = vld [vmem:[#allocation5 + $0x178] sm:$0xff]
    %v155 = vld [vmem:[#allocation5 + $0x180] sm:$0xff]
    %v156 = vld [vmem:[#allocation5 + $0x188] sm:$0xff]
    %v157 = vld [vmem:[#allocation5 + $0x190] sm:$0xff]
    %v158 = vld [vmem:[#allocation5 + $0x198] sm:$0xff]
    %v159 = vld [vmem:[#allocation5 + $0x1a0] sm:$0xff]
    %v160 = vld [vmem:[#allocation5 + $0x1a8] sm:$0xff]
    %v161 = vld [vmem:[#allocation5 + $0x1b0] sm:$0xff]
    %v162 = vld [vmem:[#allocation5 + $0x1b8] sm:$0xff]
    %v163 = vld [vmem:[#allocation5 + $0x1c0] sm:$0xff]
    %v164 = vld [vmem:[#allocation5 + $0x1c8] sm:$0xff]
    %v165 = vld [vmem:[#allocation5 + $0x1d0] sm:$0xff]
    %v166 = vld [vmem:[#allocation5 + $0x1d8] sm:$0xff]
    %v167 = vld [vmem:[#allocation5 + $0x1e0] sm:$0xff]
    %v168 = vld [vmem:[#allocation5 + $0x1e8] sm:$0xff]
    %v169 = vld [vmem:[#allocation5 + $0x1f0] sm:$0xff]
    %v170 = vld [vmem:[#allocation5 + $0x1f8] sm:$0xff]
    %v171 = vld [vmem:[#allocation7] sm:$0x3]
    %v173 = vperm.slane %v171, 0
    %v174 = vperm.slane %v171, 1
    %v181 = vunpack.c.l.b16 %v103
    %v182 = vunpack.c.h.b16 %v103
    %v183 = vunpack.c.l.b16 %v104
    %v184 = vunpack.c.h.b16 %v104
    %v185 = vunpack.c.l.b16 %v105
    %v186 = vunpack.c.h.b16 %v105
    %v187 = vunpack.c.l.b16 %v106
    %v188 = vunpack.c.h.b16 %v106
    %v189 = vpack.c.b16 %v185, %v181
    %v190 = vpack.c.b16 %v186, %v182
    %v191 = vpack.c.b16 %v187, %v183
    %v192 = vpack.c.b16 %v188, %v184
    %v261 = vunpack.c.l.b16 %v107
    %v262 = vunpack.c.h.b16 %v107
    %v263 = vunpack.c.l.b16 %v108
    %v264 = vunpack.c.h.b16 %v108
    %v265 = vunpack.c.l.b16 %v109
    %v266 = vunpack.c.h.b16 %v109
    %v267 = vunpack.c.l.b16 %v110
    %v268 = vunpack.c.h.b16 %v110
    %v269 = vunpack.c.l.b16 %v111
    %v270 = vunpack.c.h.b16 %v111
    %v271 = vunpack.c.l.b16 %v112
    %v272 = vunpack.c.h.b16 %v112
    %v273 = vunpack.c.l.b16 %v113
    %v274 = vunpack.c.h.b16 %v113
    %v275 = vunpack.c.l.b16 %v114
    %v276 = vunpack.c.h.b16 %v114
    %v277 = vunpack.c.l.b16 %v115
    %v278 = vunpack.c.h.b16 %v115
    %v279 = vunpack.c.l.b16 %v116
    %v280 = vunpack.c.h.b16 %v116
    %v281 = vunpack.c.l.b16 %v117
    %v282 = vunpack.c.h.b16 %v117
    %v283 = vunpack.c.l.b16 %v118
    %v284 = vunpack.c.h.b16 %v118
    %v285 = vunpack.c.l.b16 %v119
    %v286 = vunpack.c.h.b16 %v119
    %v287 = vunpack.c.l.b16 %v120
    %v288 = vunpack.c.h.b16 %v120
    %v289 = vunpack.c.l.b16 %v121
    %v290 = vunpack.c.h.b16 %v121
    %v291 = vunpack.c.l.b16 %v122
    %v292 = vunpack.c.h.b16 %v122
    %v293 = vunpack.c.l.b16 %v123
    %v294 = vunpack.c.h.b16 %v123
    %v295 = vunpack.c.l.b16 %v124
    %v296 = vunpack.c.h.b16 %v124
    %v297 = vunpack.c.l.b16 %v125
    %v298 = vunpack.c.h.b16 %v125
    %v299 = vunpack.c.l.b16 %v126
    %v300 = vunpack.c.h.b16 %v126
    %v301 = vunpack.c.l.b16 %v127
    %v302 = vunpack.c.h.b16 %v127
    %v303 = vunpack.c.l.b16 %v128
    %v304 = vunpack.c.h.b16 %v128
    %v305 = vunpack.c.l.b16 %v129
    %v306 = vunpack.c.h.b16 %v129
    %v307 = vunpack.c.l.b16 %v130
    %v308 = vunpack.c.h.b16 %v130
    %v309 = vunpack.c.l.b16 %v131
    %v310 = vunpack.c.h.b16 %v131
    %v311 = vunpack.c.l.b16 %v132
    %v312 = vunpack.c.h.b16 %v132
    %v313 = vunpack.c.l.b16 %v133
    %v314 = vunpack.c.h.b16 %v133
    %v315 = vunpack.c.l.b16 %v134
    %v316 = vunpack.c.h.b16 %v134
    %v317 = vunpack.c.l.b16 %v135
    %v318 = vunpack.c.h.b16 %v135
    %v319 = vunpack.c.l.b16 %v136
    %v320 = vunpack.c.h.b16 %v136
    %v321 = vunpack.c.l.b16 %v137
    %v322 = vunpack.c.h.b16 %v137
    %v323 = vunpack.c.l.b16 %v138
    %v324 = vunpack.c.h.b16 %v138
    %v325 = vunpack.c.l.b16 %v139
    %v326 = vunpack.c.h.b16 %v139
    %v327 = vunpack.c.l.b16 %v140
    %v328 = vunpack.c.h.b16 %v140
    %v329 = vunpack.c.l.b16 %v141
    %v330 = vunpack.c.h.b16 %v141
    %v331 = vunpack.c.l.b16 %v142
    %v332 = vunpack.c.h.b16 %v142
    %v333 = vunpack.c.l.b16 %v143
    %v334 = vunpack.c.h.b16 %v143
    %v335 = vunpack.c.l.b16 %v144
    %v336 = vunpack.c.h.b16 %v144
    %v337 = vunpack.c.l.b16 %v145
    %v338 = vunpack.c.h.b16 %v145
    %v339 = vunpack.c.l.b16 %v146
    %v340 = vunpack.c.h.b16 %v146
    %v341 = vunpack.c.l.b16 %v147
    %v342 = vunpack.c.h.b16 %v147
    %v343 = vunpack.c.l.b16 %v148
    %v344 = vunpack.c.h.b16 %v148
    %v345 = vunpack.c.l.b16 %v149
    %v346 = vunpack.c.h.b16 %v149
    %v347 = vunpack.c.l.b16 %v150
    %v348 = vunpack.c.h.b16 %v150
    %v349 = vunpack.c.l.b16 %v151
    %v350 = vunpack.c.h.b16 %v151
    %v351 = vunpack.c.l.b16 %v152
    %v352 = vunpack.c.h.b16 %v152
    %v353 = vunpack.c.l.b16 %v153
    %v354 = vunpack.c.h.b16 %v153
    %v355 = vunpack.c.l.b16 %v154
    %v356 = vunpack.c.h.b16 %v154
    %v357 = vunpack.c.l.b16 %v155
    %v358 = vunpack.c.h.b16 %v155
    %v359 = vunpack.c.l.b16 %v156
    %v360 = vunpack.c.h.b16 %v156
    %v361 = vunpack.c.l.b16 %v157
    %v362 = vunpack.c.h.b16 %v157
    %v363 = vunpack.c.l.b16 %v158
    %v364 = vunpack.c.h.b16 %v158
    %v365 = vunpack.c.l.b16 %v159
    %v366 = vunpack.c.h.b16 %v159
    %v367 = vunpack.c.l.b16 %v160
    %v368 = vunpack.c.h.b16 %v160
    %v369 = vunpack.c.l.b16 %v161
    %v370 = vunpack.c.h.b16 %v161
    %v371 = vunpack.c.l.b16 %v162
    %v372 = vunpack.c.h.b16 %v162
    %v373 = vunpack.c.l.b16 %v163
    %v374 = vunpack.c.h.b16 %v163
    %v375 = vunpack.c.l.b16 %v164
    %v376 = vunpack.c.h.b16 %v164
    %v377 = vunpack.c.l.b16 %v165
    %v378 = vunpack.c.h.b16 %v165
    %v379 = vunpack.c.l.b16 %v166
    %v380 = vunpack.c.h.b16 %v166
    %v381 = vunpack.c.l.b16 %v167
    %v382 = vunpack.c.h.b16 %v167
    %v383 = vunpack.c.l.b16 %v168
    %v384 = vunpack.c.h.b16 %v168
    %v385 = vunpack.c.l.b16 %v169
    %v386 = vunpack.c.h.b16 %v169
    %v387 = vunpack.c.l.b16 %v170
    %v388 = vunpack.c.h.b16 %v170
    %v389 = vpack.c.b16 %v263, %v261
    %v390 = vpack.c.b16 %v264, %v262
    %v391 = vpack.c.b16 %v267, %v265
    %v392 = vpack.c.b16 %v268, %v266
    %v393 = vpack.c.b16 %v271, %v269
    %v394 = vpack.c.b16 %v272, %v270
    %v395 = vpack.c.b16 %v275, %v273
    %v396 = vpack.c.b16 %v276, %v274
    %v397 = vpack.c.b16 %v279, %v277
    %v398 = vpack.c.b16 %v280, %v278
    %v399 = vpack.c.b16 %v283, %v281
    %v400 = vpack.c.b16 %v284, %v282
    %v401 = vpack.c.b16 %v287, %v285
    %v402 = vpack.c.b16 %v288, %v286
    %v403 = vpack.c.b16 %v291, %v289
    %v404 = vpack.c.b16 %v292, %v290
    %v405 = vpack.c.b16 %v295, %v293
    %v406 = vpack.c.b16 %v296, %v294
    %v407 = vpack.c.b16 %v299, %v297
    %v408 = vpack.c.b16 %v300, %v298
    %v409 = vpack.c.b16 %v303, %v301
    %v410 = vpack.c.b16 %v304, %v302
    %v411 = vpack.c.b16 %v307, %v305
    %v412 = vpack.c.b16 %v308, %v306
    %v413 = vpack.c.b16 %v311, %v309
    %v414 = vpack.c.b16 %v312, %v310
    %v415 = vpack.c.b16 %v315, %v313
    %v416 = vpack.c.b16 %v316, %v314
    %v417 = vpack.c.b16 %v319, %v317
    %v418 = vpack.c.b16 %v320, %v318
    %v419 = vpack.c.b16 %v323, %v321
    %v420 = vpack.c.b16 %v324, %v322
    %v421 = vpack.c.b16 %v327, %v325
    %v422 = vpack.c.b16 %v328, %v326
    %v423 = vpack.c.b16 %v331, %v329
    %v424 = vpack.c.b16 %v332, %v330
    %v425 = vpack.c.b16 %v335, %v333
    %v426 = vpack.c.b16 %v336, %v334
    %v427 = vpack.c.b16 %v339, %v337
    %v428 = vpack.c.b16 %v340, %v338
    %v429 = vpack.c.b16 %v343, %v341
    %v430 = vpack.c.b16 %v344, %v342
    %v431 = vpack.c.b16 %v347, %v345
    %v432 = vpack.c.b16 %v348, %v346
    %v433 = vpack.c.b16 %v351, %v349
    %v434 = vpack.c.b16 %v352, %v350
    %v435 = vpack.c.b16 %v355, %v353
    %v436 = vpack.c.b16 %v356, %v354
    %v437 = vpack.c.b16 %v359, %v357
    %v438 = vpack.c.b16 %v360, %v358
    %v439 = vpack.c.b16 %v363, %v361
    %v440 = vpack.c.b16 %v364, %v362
    %v441 = vpack.c.b16 %v367, %v365
    %v442 = vpack.c.b16 %v368, %v366
    %v443 = vpack.c.b16 %v371, %v369
    %v444 = vpack.c.b16 %v372, %v370
    %v445 = vpack.c.b16 %v375, %v373
    %v446 = vpack.c.b16 %v376, %v374
    %v447 = vpack.c.b16 %v379, %v377
    %v448 = vpack.c.b16 %v380, %v378
    %v449 = vpack.c.b16 %v383, %v381
    %v450 = vpack.c.b16 %v384, %v382
    %v451 = vpack.c.b16 %v387, %v385
    %v452 = vpack.c.b16 %v388, %v386
    %517 = vmatpush.bf16.msra.mxu0 %v403
    %518 = vmatpush.bf16.msra.mxu0 %v401
    %519 = vmatpush.bf16.msra.mxu0 %v399
    %520 = vmatpush.bf16.msra.mxu0 %v397
    %521 = vmatpush.bf16.msra.mxu0 %v395
    %522 = vmatpush.bf16.msra.mxu0 %v393
    %523 = vmatpush.bf16.msra.mxu0 %v391
    %524 = vmatpush.bf16.msra.mxu0 %v389
    %525 = vmatmul.bf16.gmra.mxu0 %v189
    %v526 = vpop.f32.mrf.mxu0
    %v527 = vadd.f32 %v173, %v526
    %v528 = vpop.f32.mrf.mxu0
    %v529 = vadd.f32 %v173, %v528
    %530 = vdwg.mxu0
    %531 = vmatpush.bf16.msra.mxu0 %v419
    %532 = vmatpush.bf16.msra.mxu0 %v417
    %533 = vmatpush.bf16.msra.mxu0 %v415
    %534 = vmatpush.bf16.msra.mxu0 %v413
    %535 = vmatpush.bf16.msra.mxu0 %v411
    %536 = vmatpush.bf16.msra.mxu0 %v409
    %537 = vmatpush.bf16.msra.mxu0 %v407
    %538 = vmatpush.bf16.msra.mxu0 %v405
    %539 = vmatmul.bf16.gmra.mxu0 %v190
    %v540 = vpop.f32.mrf.mxu0
    %v541 = vadd.f32 %v527, %v540
    %v542 = vpop.f32.mrf.mxu0
    %v543 = vadd.f32 %v529, %v542
    %544 = vdwg.mxu0
    %545 = vmatpush.bf16.msra.mxu0 %v435
    %546 = vmatpush.bf16.msra.mxu0 %v433
    %547 = vmatpush.bf16.msra.mxu0 %v431
    %548 = vmatpush.bf16.msra.mxu0 %v429
    %549 = vmatpush.bf16.msra.mxu0 %v427
    %550 = vmatpush.bf16.msra.mxu0 %v425
    %551 = vmatpush.bf16.msra.mxu0 %v423
    %552 = vmatpush.bf16.msra.mxu0 %v421
    %553 = vmatmul.bf16.gmra.mxu0 %v191
    %v554 = vpop.f32.mrf.mxu0
    %v555 = vadd.f32 %v541, %v554
    %v556 = vpop.f32.mrf.mxu0
    %v557 = vadd.f32 %v543, %v556
    %558 = vdwg.mxu0
    %559 = vmatpush.bf16.msra.mxu0 %v451
    %560 = vmatpush.bf16.msra.mxu0 %v449
    %561 = vmatpush.bf16.msra.mxu0 %v447
    %562 = vmatpush.bf16.msra.mxu0 %v445
    %563 = vmatpush.bf16.msra.mxu0 %v443
    %564 = vmatpush.bf16.msra.mxu0 %v441
    %565 = vmatpush.bf16.msra.mxu0 %v439
    %566 = vmatpush.bf16.msra.mxu0 %v437
    %567 = vmatmul.bf16.gmra.mxu0 %v192
    %v568 = vpop.f32.mrf.mxu0
    %v569 = vadd.f32 %v555, %v568
    %v570 = vpop.f32.mrf.mxu0
    %v571 = vadd.f32 %v557, %v570
    %572 = vdwg.mxu0
    %573 = vmatpush.bf16.msra.mxu0 %v404
    %574 = vmatpush.bf16.msra.mxu0 %v402
    %575 = vmatpush.bf16.msra.mxu0 %v400
    %576 = vmatpush.bf16.msra.mxu0 %v398
    %577 = vmatpush.bf16.msra.mxu0 %v396
    %578 = vmatpush.bf16.msra.mxu0 %v394
    %579 = vmatpush.bf16.msra.mxu0 %v392
    %580 = vmatpush.bf16.msra.mxu0 %v390
    %581 = vmatmul.bf16.gmra.mxu0 %v189
    %v582 = vpop.f32.mrf.mxu0
    %v583 = vadd.f32 %v174, %v582
    %v584 = vpop.f32.mrf.mxu0
    %v585 = vadd.f32 %v174, %v584
    %586 = vdwg.mxu0
    %587 = vmatpush.bf16.msra.mxu0 %v420
    %588 = vmatpush.bf16.msra.mxu0 %v418
    %589 = vmatpush.bf16.msra.mxu0 %v416
    %590 = vmatpush.bf16.msra.mxu0 %v414
    %591 = vmatpush.bf16.msra.mxu0 %v412
    %592 = vmatpush.bf16.msra.mxu0 %v410
    %593 = vmatpush.bf16.msra.mxu0 %v408
    %594 = vmatpush.bf16.msra.mxu0 %v406
    %595 = vmatmul.bf16.gmra.mxu0 %v190
    %v596 = vpop.f32.mrf.mxu0
    %v597 = vadd.f32 %v583, %v596
    %v598 = vpop.f32.mrf.mxu0
    %v599 = vadd.f32 %v585, %v598
    %600 = vdwg.mxu0
    %601 = vmatpush.bf16.msra.mxu0 %v436
    %602 = vmatpush.bf16.msra.mxu0 %v434
    %603 = vmatpush.bf16.msra.mxu0 %v432
    %604 = vmatpush.bf16.msra.mxu0 %v430
    %605 = vmatpush.bf16.msra.mxu0 %v428
    %606 = vmatpush.bf16.msra.mxu0 %v426
    %607 = vmatpush.bf16.msra.mxu0 %v424
    %608 = vmatpush.bf16.msra.mxu0 %v422
    %609 = vmatmul.bf16.gmra.mxu0 %v191
    %v610 = vpop.f32.mrf.mxu0
    %v611 = vadd.f32 %v597, %v610
    %v612 = vpop.f32.mrf.mxu0
    %v613 = vadd.f32 %v599, %v612
    %614 = vdwg.mxu0
    %615 = vmatpush.bf16.msra.mxu0 %v452
    %616 = vmatpush.bf16.msra.mxu0 %v450
    %617 = vmatpush.bf16.msra.mxu0 %v448
    %618 = vmatpush.bf16.msra.mxu0 %v446
    %619 = vmatpush.bf16.msra.mxu0 %v444
    %620 = vmatpush.bf16.msra.mxu0 %v442
    %621 = vmatpush.bf16.msra.mxu0 %v440
    %622 = vmatpush.bf16.msra.mxu0 %v438
    %623 = vmatmul.bf16.gmra.mxu0 %v192
    %v624 = vpop.f32.mrf.mxu0
    %v625 = vadd.f32 %v611, %v624
    %v626 = vpop.f32.mrf.mxu0
    %v627 = vadd.f32 %v613, %v626
    %628 = vdwg.mxu0
    %v629 = vpack.c.bf16 %v571, %v569
    %v630 = vpack.c.bf16 %v627, %v625
    %v631 = vld [vmem:[#allocation8] sm:$0xff]
    %v632 = vld [vmem:[#allocation8 + $0x8] sm:$0xff]
    %v633 = vld [vmem:[#allocation8 + $0x10] sm:$0xff]
    %v634 = vld [vmem:[#allocation8 + $0x18] sm:$0xff]
    %v635 = vld [vmem:[#allocation8 + $0x20] sm:$0xff]
    %v636 = vld [vmem:[#allocation8 + $0x28] sm:$0xff]
    %v637 = vld [vmem:[#allocation8 + $0x30] sm:$0xff]
    %v638 = vld [vmem:[#allocation8 + $0x38] sm:$0xff]
    %v639 = vld [vmem:[#allocation8 + $0x40] sm:$0xff]
    %v640 = vld [vmem:[#allocation8 + $0x48] sm:$0xff]
    %v641 = vld [vmem:[#allocation8 + $0x50] sm:$0xff]
    %v642 = vld [vmem:[#allocation8 + $0x58] sm:$0xff]
    %v643 = vld [vmem:[#allocation8 + $0x60] sm:$0xff]
    %v644 = vld [vmem:[#allocation8 + $0x68] sm:$0xff]
    %v645 = vld [vmem:[#allocation8 + $0x70] sm:$0xff]
    %v646 = vld [vmem:[#allocation8 + $0x78] sm:$0xff]
    %v647 = vld [vmem:[#allocation8 + $0x80] sm:$0xff]
    %v648 = vld [vmem:[#allocation8 + $0x88] sm:$0xff]
    %v649 = vld [vmem:[#allocation8 + $0x90] sm:$0xff]
    %v650 = vld [vmem:[#allocation8 + $0x98] sm:$0xff]
    %v651 = vld [vmem:[#allocation8 + $0xa0] sm:$0xff]
    %v652 = vld [vmem:[#allocation8 + $0xa8] sm:$0xff]
    %v653 = vld [vmem:[#allocation8 + $0xb0] sm:$0xff]
    %v654 = vld [vmem:[#allocation8 + $0xb8] sm:$0xff]
    %v655 = vld [vmem:[#allocation8 + $0xc0] sm:$0xff]
    %v656 = vld [vmem:[#allocation8 + $0xc8] sm:$0xff]
    %v657 = vld [vmem:[#allocation8 + $0xd0] sm:$0xff]
    %v658 = vld [vmem:[#allocation8 + $0xd8] sm:$0xff]
    %v659 = vld [vmem:[#allocation8 + $0xe0] sm:$0xff]
    %v660 = vld [vmem:[#allocation8 + $0xe8] sm:$0xff]
    %v661 = vld [vmem:[#allocation8 + $0xf0] sm:$0xff]
    %v662 = vld [vmem:[#allocation8 + $0xf8] sm:$0xff]
    %v663 = vld [vmem:[%s4] sm:$0x3]
    %v665 = vperm.slane %v663, 0
    %v666 = vperm.slane %v663, 1
    %v701 = vunpack.c.l.b16 %v631
    %v702 = vunpack.c.h.b16 %v631
    %v703 = vunpack.c.l.b16 %v632
    %v704 = vunpack.c.h.b16 %v632
    %v705 = vunpack.c.l.b16 %v633
    %v706 = vunpack.c.h.b16 %v633
    %v707 = vunpack.c.l.b16 %v634
    %v708 = vunpack.c.h.b16 %v634
    %v709 = vunpack.c.l.b16 %v635
    %v710 = vunpack.c.h.b16 %v635
    %v711 = vunpack.c.l.b16 %v636
    %v712 = vunpack.c.h.b16 %v636
    %v713 = vunpack.c.l.b16 %v637
    %v714 = vunpack.c.h.b16 %v637
    %v715 = vunpack.c.l.b16 %v638
    %v716 = vunpack.c.h.b16 %v638
    %v717 = vunpack.c.l.b16 %v639
    %v718 = vunpack.c.h.b16 %v639
    %v719 = vunpack.c.l.b16 %v640
    %v720 = vunpack.c.h.b16 %v640
    %v721 = vunpack.c.l.b16 %v641
    %v722 = vunpack.c.h.b16 %v641
    %v723 = vunpack.c.l.b16 %v642
    %v724 = vunpack.c.h.b16 %v642
    %v725 = vunpack.c.l.b16 %v643
    %v726 = vunpack.c.h.b16 %v643
    %v727 = vunpack.c.l.b16 %v644
    %v728 = vunpack.c.h.b16 %v644
    %v729 = vunpack.c.l.b16 %v645
    %v730 = vunpack.c.h.b16 %v645
    %v731 = vunpack.c.l.b16 %v646
    %v732 = vunpack.c.h.b16 %v646
    %v733 = vunpack.c.l.b16 %v647
    %v734 = vunpack.c.h.b16 %v647
    %v735 = vunpack.c.l.b16 %v648
    %v736 = vunpack.c.h.b16 %v648
    %v737 = vunpack.c.l.b16 %v649
    %v738 = vunpack.c.h.b16 %v649
    %v739 = vunpack.c.l.b16 %v650
    %v740 = vunpack.c.h.b16 %v650
    %v741 = vunpack.c.l.b16 %v651
    %v742 = vunpack.c.h.b16 %v651
    %v743 = vunpack.c.l.b16 %v652
    %v744 = vunpack.c.h.b16 %v652
    %v745 = vunpack.c.l.b16 %v653
    %v746 = vunpack.c.h.b16 %v653
    %v747 = vunpack.c.l.b16 %v654
    %v748 = vunpack.c.h.b16 %v654
    %v749 = vunpack.c.l.b16 %v655
    %v750 = vunpack.c.h.b16 %v655
    %v751 = vunpack.c.l.b16 %v656
    %v752 = vunpack.c.h.b16 %v656
    %v753 = vunpack.c.l.b16 %v657
    %v754 = vunpack.c.h.b16 %v657
    %v755 = vunpack.c.l.b16 %v658
    %v756 = vunpack.c.h.b16 %v658
    %v757 = vunpack.c.l.b16 %v659
    %v758 = vunpack.c.h.b16 %v659
    %v759 = vunpack.c.l.b16 %v660
    %v760 = vunpack.c.h.b16 %v660
    %v761 = vunpack.c.l.b16 %v661
    %v762 = vunpack.c.h.b16 %v661
    %v763 = vunpack.c.l.b16 %v662
    %v764 = vunpack.c.h.b16 %v662
    %v765 = vpack.c.b16 %v703, %v701
    %v766 = vpack.c.b16 %v704, %v702
    %v767 = vpack.c.b16 %v707, %v705
    %v768 = vpack.c.b16 %v708, %v706
    %v769 = vpack.c.b16 %v711, %v709
    %v770 = vpack.c.b16 %v712, %v710
    %v771 = vpack.c.b16 %v715, %v713
    %v772 = vpack.c.b16 %v716, %v714
    %v773 = vpack.c.b16 %v719, %v717
    %v774 = vpack.c.b16 %v720, %v718
    %v775 = vpack.c.b16 %v723, %v721
    %v776 = vpack.c.b16 %v724, %v722
    %v777 = vpack.c.b16 %v727, %v725
    %v778 = vpack.c.b16 %v728, %v726
    %v779 = vpack.c.b16 %v731, %v729
    %v780 = vpack.c.b16 %v732, %v730
    %v781 = vpack.c.b16 %v735, %v733
    %v782 = vpack.c.b16 %v736, %v734
    %v783 = vpack.c.b16 %v739, %v737
    %v784 = vpack.c.b16 %v740, %v738
    %v785 = vpack.c.b16 %v743, %v741
    %v786 = vpack.c.b16 %v744, %v742
    %v787 = vpack.c.b16 %v747, %v745
    %v788 = vpack.c.b16 %v748, %v746
    %v789 = vpack.c.b16 %v751, %v749
    %v790 = vpack.c.b16 %v752, %v750
    %v791 = vpack.c.b16 %v755, %v753
    %v792 = vpack.c.b16 %v756, %v754
    %v793 = vpack.c.b16 %v759, %v757
    %v794 = vpack.c.b16 %v760, %v758
    %v795 = vpack.c.b16 %v763, %v761
    %v796 = vpack.c.b16 %v764, %v762
    %829 = vmatpush.bf16.msra.mxu0 %v779
    %830 = vmatpush.bf16.msra.mxu0 %v777
    %831 = vmatpush.bf16.msra.mxu0 %v775
    %832 = vmatpush.bf16.msra.mxu0 %v773
    %833 = vmatpush.bf16.msra.mxu0 %v771
    %834 = vmatpush.bf16.msra.mxu0 %v769
    %835 = vmatpush.bf16.msra.mxu0 %v767
    %836 = vmatpush.bf16.msra.mxu0 %v765
    %837 = vmatmul.bf16.gmra.mxu0 %v629
    %v838 = vpop.f32.mrf.mxu0
    %v839 = vadd.f32 %v665, %v838
    %v840 = vpop.f32.mrf.mxu0
    %v841 = vadd.f32 %v665, %v840
    %842 = vdwg.mxu0
    %843 = vmatpush.bf16.msra.mxu0 %v795
    %844 = vmatpush.bf16.msra.mxu0 %v793
    %845 = vmatpush.bf16.msra.mxu0 %v791
    %846 = vmatpush.bf16.msra.mxu0 %v789
    %847 = vmatpush.bf16.msra.mxu0 %v787
    %848 = vmatpush.bf16.msra.mxu0 %v785
    %849 = vmatpush.bf16.msra.mxu0 %v783
    %850 = vmatpush.bf16.msra.mxu0 %v781
    %851 = vmatmul.bf16.gmra.mxu0 %v630
    %v852 = vpop.f32.mrf.mxu0
    %v853 = vadd.f32 %v839, %v852
    %v854 = vpop.f32.mrf.mxu0
    %v855 = vadd.f32 %v841, %v854
    %856 = vdwg.mxu0
    %857 = vmatpush.bf16.msra.mxu0 %v780
    %858 = vmatpush.bf16.msra.mxu0 %v778
    %859 = vmatpush.bf16.msra.mxu0 %v776
    %860 = vmatpush.bf16.msra.mxu0 %v774
    %861 = vmatpush.bf16.msra.mxu0 %v772
    %862 = vmatpush.bf16.msra.mxu0 %v770
    %863 = vmatpush.bf16.msra.mxu0 %v768
    %864 = vmatpush.bf16.msra.mxu0 %v766
    %865 = vmatmul.bf16.gmra.mxu0 %v629
    %v866 = vpop.f32.mrf.mxu0
    %v867 = vadd.f32 %v666, %v866
    %v868 = vpop.f32.mrf.mxu0
    %v869 = vadd.f32 %v666, %v868
    %870 = vdwg.mxu0
    %871 = vmatpush.bf16.msra.mxu0 %v796
    %872 = vmatpush.bf16.msra.mxu0 %v794
    %873 = vmatpush.bf16.msra.mxu0 %v792
    %874 = vmatpush.bf16.msra.mxu0 %v790
    %875 = vmatpush.bf16.msra.mxu0 %v788
    %876 = vmatpush.bf16.msra.mxu0 %v786
    %877 = vmatpush.bf16.msra.mxu0 %v784
    %878 = vmatpush.bf16.msra.mxu0 %v782
    %879 = vmatmul.bf16.gmra.mxu0 %v630
    %v880 = vpop.f32.mrf.mxu0
    %v881 = vadd.f32 %v867, %v880
    %v882 = vpop.f32.mrf.mxu0
    %v883 = vadd.f32 %v869, %v882
    %884 = vdwg.mxu0
    %v885 = vxor.u32 %v853, 2147483648
    %v886 = vxor.u32 %v881, 2147483648
    %v887 = vxor.u32 %v855, 2147483648
    %v888 = vxor.u32 %v883, 2147483648
    %v889 = vmul.f32 %v885, 1.442695
    %v890 = vpow.pop %v889
    %v891 = vmul.f32 %v886, 1.442695
    %v892 = vpow.pop %v891
    %v893 = vmul.f32 %v887, 1.442695
    %v894 = vpow.pop %v893
    %v895 = vmul.f32 %v888, 1.442695
    %v896 = vpow.pop %v895
    %v897 = vadd.f32 %v890, 1.0
    %v898 = vadd.f32 %v892, 1.0
    %v899 = vadd.f32 %v894, 1.0
    %v900 = vadd.f32 %v896, 1.0
    %v901 = vrcp.pop %v897
    %v902 = vmul.f32 %v897, %v901
    %v903 = vsub.f32 1.0, %v902
    %v904 = vmul.f32 %v901, %v903
    %v905 = vadd.f32 %v901, %v904
    %vm906 = vweird.f32 %v897
    %vm907 = vweird.f32 %v901
    %vm908 = vmor %vm906, %vm907
    %v909 = vsel %vm908, %v901, %v905
    %v910 = vand.u32 2147483647, %v897
    %vm911 = vcmp.eq.f32.partialorder %v910, 8.507059e+37
    %v912 = vand.u32 %v897, 2147483648
    %v913 = vor.u32 1.1754944e-38, %v912
    %v914 = vsel %vm911, %v913, %v909
    %v915 = vmul.f32 1.0, %v914
    %v916 = vrcp.pop %v898
    %v917 = vmul.f32 %v898, %v916
    %v918 = vsub.f32 1.0, %v917
    %v919 = vmul.f32 %v916, %v918
    %v920 = vadd.f32 %v916, %v919
    %vm921 = vweird.f32 %v898
    %vm922 = vweird.f32 %v916
    %vm923 = vmor %vm921, %vm922
    %v924 = vsel %vm923, %v916, %v920
    %v925 = vand.u32 2147483647, %v898
    %vm926 = vcmp.eq.f32.partialorder %v925, 8.507059e+37
    %v927 = vand.u32 %v898, 2147483648
    %v928 = vor.u32 1.1754944e-38, %v927
    %v929 = vsel %vm926, %v928, %v924
    %v930 = vmul.f32 1.0, %v929
    %v931 = vrcp.pop %v899
    %v932 = vmul.f32 %v899, %v931
    %v933 = vsub.f32 1.0, %v932
    %v934 = vmul.f32 %v931, %v933
    %v935 = vadd.f32 %v931, %v934
    %vm936 = vweird.f32 %v899
    %vm937 = vweird.f32 %v931
    %vm938 = vmor %vm936, %vm937
    %v939 = vsel %vm938, %v931, %v935
    %v940 = vand.u32 2147483647, %v899
    %vm941 = vcmp.eq.f32.partialorder %v940, 8.507059e+37
    %v942 = vand.u32 %v899, 2147483648
    %v943 = vor.u32 1.1754944e-38, %v942
    %v944 = vsel %vm941, %v943, %v939
    %v945 = vmul.f32 1.0, %v944
    %v946 = vrcp.pop %v900
    %v947 = vmul.f32 %v900, %v946
    %v948 = vsub.f32 1.0, %v947
    %v949 = vmul.f32 %v946, %v948
    %v950 = vadd.f32 %v946, %v949
    %vm951 = vweird.f32 %v900
    %vm952 = vweird.f32 %v946
    %vm953 = vmor %vm951, %vm952
    %v954 = vsel %vm953, %v946, %v950
    %v955 = vand.u32 2147483647, %v900
    %vm956 = vcmp.eq.f32.partialorder %v955, 8.507059e+37
    %v957 = vand.u32 %v900, 2147483648
    %v958 = vor.u32 1.1754944e-38, %v957
    %v959 = vsel %vm956, %v958, %v954
    %v960 = vmul.f32 1.0, %v959
    %v961 = vmul.f32 %v915, %v569
    %v962 = vmul.f32 %v930, %v625
    %v963 = vmul.f32 %v945, %v571
    %v964 = vmul.f32 %v960, %v627
    %v965 = vpack.c.bf16 %v963, %v961
    %v966 = vpack.c.bf16 %v964, %v962
    %v967 = vld [vmem:[#allocation10] sm:$0xf]
    %v968 = vld [vmem:[#allocation10 + $0x4] sm:$0xf]
    %v969 = vld [vmem:[#allocation10 + $0x8] sm:$0xf]
    %v970 = vld [vmem:[#allocation10 + $0xc] sm:$0xf]
    %v971 = vld [vmem:[#allocation10 + $0x10] sm:$0xf]
    %v972 = vld [vmem:[#allocation10 + $0x14] sm:$0xf]
    %v973 = vld [vmem:[#allocation10 + $0x18] sm:$0xf]
    %v974 = vld [vmem:[#allocation10 + $0x1c] sm:$0xf]
    %v975 = vld [vmem:[#allocation10 + $0x20] sm:$0xf]
    %v976 = vld [vmem:[#allocation10 + $0x24] sm:$0xf]
    %v977 = vld [vmem:[#allocation10 + $0x28] sm:$0xf]
    %v978 = vld [vmem:[#allocation10 + $0x2c] sm:$0xf]
    %v979 = vld [vmem:[#allocation10 + $0x30] sm:$0xf]
    %v980 = vld [vmem:[#allocation10 + $0x34] sm:$0xf]
    %v981 = vld [vmem:[#allocation10 + $0x38] sm:$0xf]
    %v982 = vld [vmem:[#allocation10 + $0x3c] sm:$0xf]
    %v983 = vld [vmem:[#allocation10 + $0x40] sm:$0xf]
    %v984 = vld [vmem:[#allocation10 + $0x44] sm:$0xf]
    %v985 = vld [vmem:[#allocation10 + $0x48] sm:$0xf]
    %v986 = vld [vmem:[#allocation10 + $0x4c] sm:$0xf]
    %v987 = vld [vmem:[#allocation10 + $0x50] sm:$0xf]
    %v988 = vld [vmem:[#allocation10 + $0x54] sm:$0xf]
    %v989 = vld [vmem:[#allocation10 + $0x58] sm:$0xf]
    %v990 = vld [vmem:[#allocation10 + $0x5c] sm:$0xf]
    %v991 = vld [vmem:[#allocation10 + $0x60] sm:$0xf]
    %v992 = vld [vmem:[#allocation10 + $0x64] sm:$0xf]
    %v993 = vld [vmem:[#allocation10 + $0x68] sm:$0xf]
    %v994 = vld [vmem:[#allocation10 + $0x6c] sm:$0xf]
    %v995 = vld [vmem:[#allocation10 + $0x70] sm:$0xf]
    %v996 = vld [vmem:[#allocation10 + $0x74] sm:$0xf]
    %v997 = vld [vmem:[#allocation10 + $0x78] sm:$0xf]
    %v998 = vld [vmem:[#allocation10 + $0x7c] sm:$0xf]
    %v999 = vld [vmem:[%s6] sm:$0x1]
    %v1001 = vperm.slane %v999, 0
    %v1035 = vunpack.c.l.b16 %v967
    %v1036 = vunpack.c.l.b16 %v968
    %v1037 = vunpack.c.l.b16 %v969
    %v1038 = vunpack.c.l.b16 %v970
    %v1039 = vunpack.c.l.b16 %v971
    %v1040 = vunpack.c.l.b16 %v972
    %v1041 = vunpack.c.l.b16 %v973
    %v1042 = vunpack.c.l.b16 %v974
    %v1043 = vunpack.c.l.b16 %v975
    %v1044 = vunpack.c.l.b16 %v976
    %v1045 = vunpack.c.l.b16 %v977
    %v1046 = vunpack.c.l.b16 %v978
    %v1047 = vunpack.c.l.b16 %v979
    %v1048 = vunpack.c.l.b16 %v980
    %v1049 = vunpack.c.l.b16 %v981
    %v1050 = vunpack.c.l.b16 %v982
    %v1051 = vunpack.c.l.b16 %v983
    %v1052 = vunpack.c.l.b16 %v984
    %v1053 = vunpack.c.l.b16 %v985
    %v1054 = vunpack.c.l.b16 %v986
    %v1055 = vunpack.c.l.b16 %v987
    %v1056 = vunpack.c.l.b16 %v988
    %v1057 = vunpack.c.l.b16 %v989
    %v1058 = vunpack.c.l.b16 %v990
    %v1059 = vunpack.c.l.b16 %v991
    %v1060 = vunpack.c.l.b16 %v992
    %v1061 = vunpack.c.l.b16 %v993
    %v1062 = vunpack.c.l.b16 %v994
    %v1063 = vunpack.c.l.b16 %v995
    %v1064 = vunpack.c.l.b16 %v996
    %v1065 = vunpack.c.l.b16 %v997
    %v1066 = vunpack.c.l.b16 %v998
    %v1067 = vpack.c.b16 %v1036, %v1035
    %v1068 = vpack.c.b16 %v1038, %v1037
    %v1069 = vpack.c.b16 %v1040, %v1039
    %v1070 = vpack.c.b16 %v1042, %v1041
    %v1071 = vpack.c.b16 %v1044, %v1043
    %v1072 = vpack.c.b16 %v1046, %v1045
    %v1073 = vpack.c.b16 %v1048, %v1047
    %v1074 = vpack.c.b16 %v1050, %v1049
    %v1075 = vpack.c.b16 %v1052, %v1051
    %v1076 = vpack.c.b16 %v1054, %v1053
    %v1077 = vpack.c.b16 %v1056, %v1055
    %v1078 = vpack.c.b16 %v1058, %v1057
    %v1079 = vpack.c.b16 %v1060, %v1059
    %v1080 = vpack.c.b16 %v1062, %v1061
    %v1081 = vpack.c.b16 %v1064, %v1063
    %v1082 = vpack.c.b16 %v1066, %v1065
    %1099 = vmatpush.bf16.msra.mxu0 %v1074
    %1100 = vmatpush.bf16.msra.mxu0 %v1073
    %1101 = vmatpush.bf16.msra.mxu0 %v1072
    %1102 = vmatpush.bf16.msra.mxu0 %v1071
    %1103 = vmatpush.bf16.msra.mxu0 %v1070
    %1104 = vmatpush.bf16.msra.mxu0 %v1069
    %1105 = vmatpush.bf16.msra.mxu0 %v1068
    %1106 = vmatpush.bf16.msra.mxu0 %v1067
    %1107 = vmatmul.bf16.gmra.mxu0 %v965
    %v1108 = vpop.f32.mrf.mxu0
    %v1109 = vadd.f32 %v1001, %v1108
    %v1110 = vpop.f32.mrf.mxu0
    %v1111 = vadd.f32 %v1001, %v1110
    %1112 = vdwg.mxu0
    %1113 = vmatpush.bf16.msra.mxu0 %v1082
    %1114 = vmatpush.bf16.msra.mxu0 %v1081
    %1115 = vmatpush.bf16.msra.mxu0 %v1080
    %1116 = vmatpush.bf16.msra.mxu0 %v1079
    %1117 = vmatpush.bf16.msra.mxu0 %v1078
    %1118 = vmatpush.bf16.msra.mxu0 %v1077
    %1119 = vmatpush.bf16.msra.mxu0 %v1076
    %1120 = vmatpush.bf16.msra.mxu0 %v1075
    %1121 = vmatmul.bf16.gmra.mxu0 %v966
    %v1122 = vpop.f32.mrf.mxu0
    %v1123 = vadd.f32 %v1109, %v1122
    %v1124 = vpop.f32.mrf.mxu0
    %v1125 = vadd.f32 %v1111, %v1124
    %1126 = vdwg.mxu0
    %1127 = vst [vmem:[#allocation11] sm:$0xff] %v1123
    %1128 = vst [vmem:[#allocation11 + $0x8] sm:$0xff] %v1125
    // Predicated region
    $region50: #{tpu_custom_call.1} parent=1 // pred_check
      _
    $region51: #{tpu_custom_call.1} parent=1 // pred_check_branch
      %1130 = sbr.rel (0) target = $region53
    $region52: #{tpu_custom_call.1} parent=1 // pred_region
      %1132 = vsyncadd [#allocation4], 0
      %s1133 = sshll.u32 [#allocation11], 4
      %s1134 = int_to_ptr.vmem [resolvable:$true] %s1133
      %s1135 = sshll.u32 %s7, 4
      %s1136 = int_to_ptr.hbm [resolvable:$true] %s1135
      %1141 = dma.vmem_to_hbm [thread:$0]  %s1134, 256, %s1136, [#allocation4], 128, 128, 8
    $region53: #{tpu_custom_call.1} parent=1 // pred_fallthru
      _
    // Predicated region
    $region54: #{tpu_custom_call.1} parent=1 // pred_check
      _
    $region55: #{tpu_custom_call.1} parent=1 // pred_check_branch
      %1143 = sbr.rel (0) target = $region57
    $region56: #{tpu_custom_call.1} parent=1 // pred_region
      %1145 = dma.done [#allocation4], 256
    $region57: #{tpu_custom_call.1} parent=1 // pred_fallthru
      _
    %1146 = vsyncpa [#allocation3], 1
    %1147 = vsyncpa [#allocation6], 1
    %1148 = vsyncpa [#allocation9], 1
    %1149 = vsyncpa [#allocation4], 1

</llo_original>
